<compile_context>
chip_gen: v7x
topology: tpu7x:2x2x1
jax: 0.10.0
libtpu: 0.0.40
codegen_flags: <defaults>
</compile_context>

<pallas_src>
import functools

import jax
import jax.numpy as jnp
from jax.experimental import pallas as pl
from jax.experimental.pallas import tpu as pltpu

BETA = 0.99
EPS = 1e-8


def _cb_loss_kernel(weights_ref, logits_ref, labels_ref, out_ref, *,
                    batch_size, tile_b):
    # (TB, C) logits; bf16 -> f32 upcast happens here (halves HBM read traffic).
    logits = logits_ref[...].astype(jnp.float32)
    labels = labels_ref[...]                      # (TB, 1) int32
    weights = weights_ref[...]                    # (1, C)  f32 (pre-normalized)

    tb, c = logits.shape

    # --- numerically stable log-sum-exp over the class (lane) axis ---
    m = jnp.max(logits, axis=-1, keepdims=True)                          # (TB, 1)
    lse = m + jnp.log(jnp.sum(jnp.exp(logits - m), axis=-1, keepdims=True))

    # --- predicated selects instead of a float one-hot (fewer VALU ops/temps) ---
    class_ids = jax.lax.broadcasted_iota(jnp.int32, (1, c), 1)           # (1, C)
    eq = class_ids == labels                                             # (TB, C) bool
    w_lbl = jnp.sum(jnp.where(eq, weights, 0.0),
                    axis=-1, keepdims=True)                              # (TB, 1)
    true_logit = jnp.sum(jnp.where(eq, logits, 0.0),
                         axis=-1, keepdims=True)                         # (TB, 1)

    per_sample = w_lbl * (lse - true_logit)                              # (TB, 1)

    # --- mask padded tail rows with a SELECT so garbage NaN/inf never leaks ---
    row_ids = (pl.program_id(0) * tile_b
               + jax.lax.broadcasted_iota(jnp.int32, (tb, 1), 0))
    per_sample = jnp.where(row_ids < batch_size, per_sample, 0.0)

    # --- per-tile partial sum written as a lane-dense (1, 8, 128) block ---
    partial = jnp.sum(per_sample)
    out_ref[...] = jnp.broadcast_to(partial, out_ref.shape).astype(jnp.float32)


def _resident_weights_spec(C):
    # Constant index map -> the second pipeline buffer is dead VMEM; request 1.
    try:
        return pl.BlockSpec((1, C), lambda i: (0, 0), pipeline_mode=pl.Buffered(1))
    except TypeError:
        return pl.BlockSpec((1, C), lambda i: (0, 0))


def class_balanced_loss(logits, labels, class_counts, beta=BETA, tile_b=None):
    """logits: (B, C) f32/bf16, labels: (B,) int, class_counts: (C,) -> scalar f32."""
    B, C = logits.shape
    itemsize = jnp.dtype(logits.dtype).itemsize

    # Class-balanced weights: O(C), computed once here, VMEM-resident in-kernel.
    counts = class_counts.astype(jnp.float32)
    effective_num = 1.0 - jnp.power(jnp.float32(beta), counts)
    weights = (1.0 - jnp.float32(beta)) / (effective_num + jnp.float32(EPS))
    weights = (weights / jnp.sum(weights)).reshape(1, C).astype(jnp.float32)

    labels2d = labels.astype(jnp.int32).reshape(B, 1)

    # Per-generation VMEM capacity (v7x: 64 MiB, v5e/v6e: 128 MiB).
    try:
        vmem_cap = int(pltpu.get_tpu_info().vmem_capacity_bytes)
    except Exception:
        vmem_cap = 64 * 1024 * 1024

    c_pad = ((C + 127) // 128) * 128
    sublane = 8 * (4 // itemsize)                    # 8 for f32, 16 for bf16

    if tile_b is None:
        # Total working-set budget (inputs double-buffered + f32 temps + labels).
        budget = max(8 << 20, min(int(vmem_cap * 0.45), 56 << 20))
        per_row = (2 * c_pad * itemsize              # double-buffered logits
                   + 3 * c_pad * 4                   # f32 upcast/exp/select temps
                   + 2 * 128 * 4)                    # lane-padded (tb,1) labels
        tb = max(1, budget // per_row)
        tb = min(tb, 4096, B)                        # hard cap (small-C safety)
        if B >= sublane:
            tb = max(sublane, (tb // sublane) * sublane)
        else:
            tb = B
    else:
        tb = min(tile_b, B)

    num_tiles = pl.cdiv(B, tb)

    # Explicit scoped-VMEM limit: working set + 25% headroom, clamped under physical.
    tb_pad = ((tb + 7) // 8) * 8
    need = (2 * tb_pad * c_pad * itemsize            # logits (double-buffered)
            + 3 * tb_pad * c_pad * 4                 # f32 intermediates
            + 2 * tb_pad * 128 * 4                   # labels (lane-padded, 2 bufs)
            + 2 * 8 * c_pad * 4                      # weights (conservative: 2 bufs)
            + 2 * 8 * 128 * 4)                       # output block
    vmem_limit = max(min(int(need * 1.25) + (1 << 20),
                         min(int(vmem_cap * 0.75), 100 << 20)),
                     4 << 20)

    kernel = functools.partial(_cb_loss_kernel, batch_size=B, tile_b=tb)

    cost = pl.CostEstimate(
        flops=int(8 * B * C),
        transcendentals=int(B * C),
        bytes_accessed=int(B * C * itemsize + B * 4 + C * 4
                           + num_tiles * 8 * 128 * 4),
    )

    partials = pl.pallas_call(
        kernel,
        out_shape=jax.ShapeDtypeStruct((num_tiles, 8, 128), jnp.float32),
        grid=(num_tiles,),
        in_specs=[
            _resident_weights_spec(C),                  # weights: resident
            pl.BlockSpec((tb, C), lambda i: (i, 0)),    # logits: streamed over B
            pl.BlockSpec((tb, 1), lambda i: (i, 0)),    # labels: streamed over B
        ],
        out_specs=pl.BlockSpec((1, 8, 128), lambda i: (i, 0, 0)),
        compiler_params=pltpu.CompilerParams(
            dimension_semantics=("parallel",),          # megacore on v7x
            vmem_limit_bytes=vmem_limit),
        cost_estimate=cost,
    )(weights, logits, labels2d)

    # Tiny final reduction (num_tiles floats) in the wrapper; mean over batch.
    return jnp.sum(partials[:, 0, 0]) / jnp.float32(B)


def _reference(logits, labels, class_counts, beta=BETA):
    logits = logits.astype(jnp.float32)
    effective_num = 1.0 - jnp.power(beta, class_counts.astype(jnp.float32))
    weights = (1.0 - beta) / (effective_num + EPS)
    weights = weights / weights.sum()
    label_weights = weights[labels]
    lse = jax.nn.logsumexp(logits, axis=-1)
    ce = lse - jnp.take_along_axis(logits, labels[:, None], axis=-1)[:, 0]
    return jnp.mean(label_weights * ce)


if __name__ == "__main__":
    key = jax.random.PRNGKey(0)
    k1, k2, k3, k4 = jax.random.split(key, 4)

    # Case 1: f32 logits, batch split into two tiles (exercises grid + parallel axis).
    B1, C1 = 16, 16
    logits1 = jax.random.normal(k1, (B1, C1), dtype=jnp.float32)
    labels1 = jax.random.randint(k2, (B1,), 0, C1, dtype=jnp.int32)
    counts1 = (10.0 + 37.0 * jnp.arange(C1, dtype=jnp.float32)) % 200.0 + 1.0

    loss1 = class_balanced_loss(logits1, labels1, counts1, tile_b=8)
    jax.block_until_ready(loss1)
    ref1 = _reference(logits1, labels1, counts1)
    assert jnp.allclose(loss1, ref1, rtol=1e-5, atol=1e-5), (loss1, ref1)

    # Case 2: bf16 logits (in-kernel upcast) with a ragged tail tile (B % TB != 0).
    B2, C2 = 40, 128
    logits2 = jax.random.normal(k3, (B2, C2), dtype=jnp.float32).astype(jnp.bfloat16)
    labels2 = jax.random.randint(k4, (B2,), 0, C2, dtype=jnp.int32)
    counts2 = (5.0 + 13.0 * jnp.arange(C2, dtype=jnp.float32)) % 300.0 + 1.0

    loss2 = class_balanced_loss(logits2, labels2, counts2, tile_b=16)
    jax.block_until_ready(loss2)
    ref2 = _reference(logits2, labels2, counts2)
    assert jnp.allclose(loss2, ref2, rtol=1e-4, atol=1e-5), (loss2, ref2)

    # Case 3: auto tile heuristic path (no explicit tile_b).
    loss3 = class_balanced_loss(logits2, labels2, counts2)
    jax.block_until_ready(loss3)
    assert jnp.allclose(loss3, ref2, rtol=1e-4, atol=1e-5), (loss3, ref2)

    print("KERNEL_OK")
</pallas_src>

<mosaic_0001>
module attributes {stable_mosaic.version = 11 : i64} {
  func.func @_cb_loss_kernel(%arg0: i32, %arg1: memref<1x16xf32, #tpu.memory_space<vmem>>, %arg2: memref<8x16xf32, #tpu.memory_space<vmem>>, %arg3: memref<8x1xi32, #tpu.memory_space<vmem>>, %arg4: memref<1x8x128xf32, #tpu.memory_space<vmem>>) attributes {dimension_semantics = [#tpu.dimension_semantics<parallel>], iteration_bounds = array<i64: 2>, scalar_prefetch = 0 : i64, scratch_operands = 0 : i64, tpu.core_type = #tpu.core_type<tc>, window_params = [{pipeline_mode = #tpu.pipeline_mode<synchronous>, transform_indices = @transform_0, window_bounds = array<i64: 1, 16>}, {transform_indices = @transform_1, window_bounds = array<i64: 8, 16>}, {transform_indices = @transform_2, window_bounds = array<i64: 8, 1>}, {transform_indices = @transform_3, window_bounds = array<i64: 1, 8, 128>}]} {
    %c0 = arith.constant 0 : index
    %c0_0 = arith.constant 0 : index
    %0 = vector.load %arg2[%c0, %c0_0] : memref<8x16xf32, #tpu.memory_space<vmem>>, vector<8x16xf32>
    %c0_1 = arith.constant 0 : index
    %c0_2 = arith.constant 0 : index
    %1 = vector.load %arg3[%c0_1, %c0_2] : memref<8x1xi32, #tpu.memory_space<vmem>>, vector<8x1xi32>
    %c0_3 = arith.constant 0 : index
    %c0_4 = arith.constant 0 : index
    %2 = vector.load %arg1[%c0_3, %c0_4] : memref<1x16xf32, #tpu.memory_space<vmem>>, vector<1x16xf32>
    %cst = arith.constant dense<0xFF800000> : vector<8xf32>
    %3 = vector.multi_reduction <maximumf>, %0, %cst [1] : vector<8x16xf32> to vector<8xf32>
    %4 = vector.shape_cast %3 : vector<8xf32> to vector<8x1xf32>
    %5 = vector.broadcast %4 : vector<8x1xf32> to vector<8x16xf32>
    %6 = arith.subf %0, %5 : vector<8x16xf32>
    %7 = math.exp %6 : vector<8x16xf32>
    %cst_5 = arith.constant dense<0.000000e+00> : vector<8xf32>
    %8 = vector.multi_reduction <add>, %7, %cst_5 [1] : vector<8x16xf32> to vector<8xf32>
    %9 = vector.shape_cast %8 : vector<8xf32> to vector<8x1xf32>
    %10 = math.log %9 : vector<8x1xf32>
    %11 = arith.addf %4, %10 : vector<8x1xf32>
    %12 = tpu.iota {dimensions = array<i32: 1>} : vector<1x16xi32>
    %13 = vector.broadcast %12 : vector<1x16xi32> to vector<8x16xi32>
    %14 = vector.broadcast %1 : vector<8x1xi32> to vector<8x16xi32>
    %15 = arith.cmpi eq, %13, %14 : vector<8x16xi32>
    %cst_6 = arith.constant 0.000000e+00 : f32
    %16 = vector.shape_cast %2 : vector<1x16xf32> to vector<1x16xf32>
    %17 = vector.broadcast %16 : vector<1x16xf32> to vector<8x16xf32>
    %18 = vector.broadcast %cst_6 : f32 to vector<8x16xf32>
    %19 = arith.select %15, %17, %18 : vector<8x16xi1>, vector<8x16xf32>
    %cst_7 = arith.constant dense<0.000000e+00> : vector<8xf32>
    %20 = vector.multi_reduction <add>, %19, %cst_7 [1] : vector<8x16xf32> to vector<8xf32>
    %21 = vector.shape_cast %20 : vector<8xf32> to vector<8x1xf32>
    %cst_8 = arith.constant 0.000000e+00 : f32
    %22 = vector.broadcast %cst_8 : f32 to vector<8x16xf32>
    %23 = arith.select %15, %0, %22 : vector<8x16xi1>, vector<8x16xf32>
    %cst_9 = arith.constant dense<0.000000e+00> : vector<8xf32>
    %24 = vector.multi_reduction <add>, %23, %cst_9 [1] : vector<8x16xf32> to vector<8xf32>
    %25 = vector.shape_cast %24 : vector<8xf32> to vector<8x1xf32>
    %26 = arith.subf %11, %25 : vector<8x1xf32>
    %27 = arith.mulf %21, %26 : vector<8x1xf32>
    %c8_i32 = arith.constant 8 : i32
    %28 = arith.muli %arg0, %c8_i32 : i32
    %29 = tpu.iota {dimensions = array<i32: 0>} : vector<8x1xi32>
    %30 = vector.broadcast %28 : i32 to vector<8x1xi32>
    %31 = arith.addi %30, %29 : vector<8x1xi32>
    %c16_i32 = arith.constant 16 : i32
    %32 = vector.broadcast %c16_i32 : i32 to vector<8x1xi32>
    %33 = arith.cmpi slt, %31, %32 : vector<8x1xi32>
    %cst_10 = arith.constant 0.000000e+00 : f32
    %34 = vector.broadcast %cst_10 : f32 to vector<8x1xf32>
    %35 = arith.select %33, %27, %34 : vector<8x1xi1>, vector<8x1xf32>
    %36 = vector.shape_cast %35 : vector<8x1xf32> to vector<1x8x1xf32>
    %cst_11 = arith.constant dense<0.000000e+00> : vector<1xf32>
    %37 = vector.multi_reduction <add>, %36, %cst_11 [1, 2] : vector<1x8x1xf32> to vector<1xf32>
    %38 = vector.shape_cast %37 : vector<1xf32> to vector<1x1x1xf32>
    %39 = vector.extract %38[0, 0, 0] : f32 from vector<1x1x1xf32>
    %40 = vector.broadcast %39 : f32 to vector<1x8x128xf32>
    %c0_12 = arith.constant 0 : index
    %c0_13 = arith.constant 0 : index
    %c0_14 = arith.constant 0 : index
    %41 = vector.load %arg4[%c0_12, %c0_13, %c0_14] : memref<1x8x128xf32, #tpu.memory_space<vmem>>, vector<1x8x128xf32>
    tpu.vector_store %arg4[%c0_12, %c0_13, %c0_14], %40 {strides = array<i32>} : memref<1x8x128xf32, #tpu.memory_space<vmem>>, vector<1x8x128xf32>,
    return
  }
  func.func @transform_0(%arg0: i32) -> (i32, i32) {
    %c0_i32 = arith.constant 0 : i32
    %c0_i32_0 = arith.constant 0 : i32
    %c0_i32_1 = arith.constant 0 : i32
    return %c0_i32, %c0_i32_0 : i32, i32
  }
  func.func @transform_1(%arg0: i32) -> (i32, i32) {
    %c0_i32 = arith.constant 0 : i32
    %c0_i32_0 = arith.constant 0 : i32
    return %arg0, %c0_i32 : i32, i32
  }
  func.func @transform_2(%arg0: i32) -> (i32, i32) {
    %c0_i32 = arith.constant 0 : i32
    %c0_i32_0 = arith.constant 0 : i32
    return %arg0, %c0_i32 : i32, i32
  }
  func.func @transform_3(%arg0: i32) -> (i32, i32, i32) {
    %c0_i32 = arith.constant 0 : i32
    %c0_i32_0 = arith.constant 0 : i32
    %c0_i32_1 = arith.constant 0 : i32
    return %arg0, %c0_i32, %c0_i32_0 : i32, i32, i32
  }
}

</mosaic_0001>

<llo_original>
// kernel: tpu_custom_call.1
$region0: #{tpu_custom_call.1}
  #allocation0 [shape = 'u32[]', space=smem, size = 0x4, offset = 0x4, fixed_abs, tag = 'smem constant byte address 0x4 - core index']
  #allocation1 [shape = 'u32[144,128]{1,0:T(1,128)}', space=vmem, size = 0x12000, scoped, tag = 'internal scratch']
  %s0 = inlined_call_operand.vmem [shape: f32[1,16], index: 0, kind: input, shape index: {}]
  %s1 = inlined_call_operand.vmem [shape: f32[16,16], index: 1, kind: input, shape index: {}]
  %s2 = inlined_call_operand.vmem [shape: s32[16,1], index: 2, kind: input, shape index: {}]
  %s3 = inlined_call_operand.hbm [shape: f32[2,8,128], index: 3, kind: output, shape index: {}]
  %s4 = sld [smem:[#allocation0]]
  $region45: #{tpu_custom_call.1} parent=0
    _
  %s6 = ssub.s32 1, %s4
  %s7 = scalar_select 0, %s6, %s4
  $region1: #{tpu_custom_call.1} parent=0
    #allocation2 [shape = 'u8[8192]{0}', space=vmem, size = 0x2000, scoped, tag = 'output window, operand 0']
    #allocation3 [shape = 's32[2]{0}', space=sflag, size = 0x8, scoped, tag = 'scoped memory for tpu_custom_call.1']
    %8 = vsyncpa [#allocation3], 0
    %s9 = scalar_lea.sflag [#allocation3], 1
    %10 = vsyncpa %s9, 0
    loop: start=0, step=1, limit=4
    $region2: #{tpu_custom_call.1} parent=1 // loop_pre_header
      _
    $region3: #{tpu_custom_call.1} parent=1 // loop_header
      %s12 = sphi 0, %s16
      %p13 = scmp.ge.s32.totalorder %s12, 4
      %s20 = sphi 0, %s20
      %s22 = sphi 0, %s20
      %s23 = sphi 0, %s22
      %s37 = sphi 0, %s23
      %s43 = sphi 0, %s45
      %s46 = sphi 0, %s43
      %s47 = sphi 0, %s46
      %s63 = sphi 0, %s47
      %s69 = sphi 0, %s71
      %s72 = sphi 0, %s69
      %s73 = sphi 0, %s72
      %s89 = sphi 0, %s73
      %s95 = sphi 0, %s97
      %s98 = sphi 0, %s95
      %s99 = sphi 0, %s98
      %s115 = sphi 0, %s99
    $region4: #{tpu_custom_call.1} parent=1 // loop_header_branch
      %15 = sbr.rel (%p13) target = $region8
    $region5: #{tpu_custom_call.1} parent=1 // loop_body
      %s17 = ssub.s32 %s12, 1
      %s18 = ssub.s32 %s12, 2
      %s19 = sadd.s32 %s12, 1
      %s21 = sadd.s32 %s20, 1
      %p24 = scmp.eq.s32.totalorder %s12, 1
      %p25 = scmp.ne.s32.totalorder %s20, %s22
      %p26 = scmp.eq.s32.totalorder %s12, 0
      %p27 = por %p25, %p26
      %p28 = scmp.ne.s32.totalorder %s20, %s22
      %p29 = scmp.eq.s32.totalorder %s17, 1
      %p30 = por %p28, %p29
      %p31 = scmp.ne.s32.totalorder %s22, %s23
      %p32 = scmp.eq.s32.totalorder %s17, 0
      %p33 = por %p31, %p32
      %p34 = scmp.ne.s32.totalorder %s22, %s23
      %p35 = scmp.eq.s32.totalorder %s18, 1
      %p36 = por %p34, %p35
      %p38 = scmp.ne.s32.totalorder %s23, %s37
      %p39 = scmp.eq.s32.totalorder %s18, 0
      %p40 = por %p38, %p39
      %s41 = ssub.s32 %s12, %s19
      %p42 = scmp.eq.s32.totalorder %s41, 0
      %s44 = sadd.s32 %s43, 1
      %s45 = scalar_select %p42, %s43, %s44
      %p48 = pneg %p42
      %p49 = scmp.eq.s32.totalorder %s12, 1
      %p50 = por %p48, %p49
      %p51 = scmp.ne.s32.totalorder %s43, %s46
      %p52 = scmp.eq.s32.totalorder %s12, 0
      %p53 = por %p51, %p52
      %p54 = scmp.ne.s32.totalorder %s43, %s46
      %p55 = scmp.eq.s32.totalorder %s17, 1
      %p56 = por %p54, %p55
      %p57 = scmp.ne.s32.totalorder %s46, %s47
      %p58 = scmp.eq.s32.totalorder %s17, 0
      %p59 = por %p57, %p58
      %p60 = scmp.ne.s32.totalorder %s46, %s47
      %p61 = scmp.eq.s32.totalorder %s18, 1
      %p62 = por %p60, %p61
      %p64 = scmp.ne.s32.totalorder %s47, %s63
      %p65 = scmp.eq.s32.totalorder %s18, 0
      %p66 = por %p64, %p65
      %s67 = ssub.s32 %s12, %s19
      %p68 = scmp.eq.s32.totalorder %s67, 0
      %s70 = sadd.s32 %s69, 1
      %s71 = scalar_select %p68, %s69, %s70
      %p74 = pneg %p68
      %p75 = scmp.eq.s32.totalorder %s12, 1
      %p76 = por %p74, %p75
      %p77 = scmp.ne.s32.totalorder %s69, %s72
      %p78 = scmp.eq.s32.totalorder %s12, 0
      %p79 = por %p77, %p78
      %p80 = scmp.ne.s32.totalorder %s69, %s72
      %p81 = scmp.eq.s32.totalorder %s17, 1
      %p82 = por %p80, %p81
      %p83 = scmp.ne.s32.totalorder %s72, %s73
      %p84 = scmp.eq.s32.totalorder %s17, 0
      %p85 = por %p83, %p84
      %p86 = scmp.ne.s32.totalorder %s72, %s73
      %p87 = scmp.eq.s32.totalorder %s18, 1
      %p88 = por %p86, %p87
      %p90 = scmp.ne.s32.totalorder %s73, %s89
      %p91 = scmp.eq.s32.totalorder %s18, 0
      %p92 = por %p90, %p91
      %s93 = ssub.s32 %s12, %s19
      %p94 = scmp.eq.s32.totalorder %s93, 0
      %s96 = sadd.s32 %s95, 1
      %s97 = scalar_select %p94, %s95, %s96
      %p100 = pneg %p94
      %p101 = scmp.eq.s32.totalorder %s12, 1
      %p102 = por %p100, %p101
      %p103 = scmp.ne.s32.totalorder %s95, %s98
      %p104 = scmp.eq.s32.totalorder %s12, 0
      %p105 = por %p103, %p104
      %p106 = scmp.ne.s32.totalorder %s95, %s98
      %p107 = scmp.eq.s32.totalorder %s17, 1
      %p108 = por %p106, %p107
      %p109 = scmp.ne.s32.totalorder %s98, %s99
      %p110 = scmp.eq.s32.totalorder %s17, 0
      %p111 = por %p109, %p110
      %p112 = scmp.ne.s32.totalorder %s98, %s99
      %p113 = scmp.eq.s32.totalorder %s18, 1
      %p114 = por %p112, %p113
      %p116 = scmp.ne.s32.totalorder %s99, %s115
      %p117 = scmp.eq.s32.totalorder %s18, 0
      %p118 = por %p116, %p117
      %p119 = scmp.le.s32.totalorder 1, %s12
      %p120 = scmp.lt.s32.totalorder %s12, 3
      %p121 = pnand %p119, %p120
      %p122 = pneg %p121
      // Predicated region
      $region9: #{tpu_custom_call.1} parent=5 // pred_check
        _
      $region10: #{tpu_custom_call.1} parent=5 // pred_check_branch
        %124 = sbr.rel (%p121) target = $region12
      $region11: #{tpu_custom_call.1} parent=5 // pred_region
        %s125 = ssub.s32 %s12, 1
        // Predicated region
        $region13: #{tpu_custom_call.1} parent=11 // pred_check
          %p126 = pneg %p33
        $region14: #{tpu_custom_call.1} parent=11 // pred_check_branch
          %128 = sbr.rel (%p126) target = $region16
        $region15: #{tpu_custom_call.1} parent=11 // pred_region
          _
        $region16: #{tpu_custom_call.1} parent=11 // pred_fallthru
          _
      $region12: #{tpu_custom_call.1} parent=5 // pred_fallthru
        _
      %p129 = scmp.lt.s32.totalorder %s12, 2
      // Predicated region
      $region17: #{tpu_custom_call.1} parent=5 // pred_check
        %p130 = pneg %p129
      $region18: #{tpu_custom_call.1} parent=5 // pred_check_branch
        %132 = sbr.rel (%p130) target = $region20
      $region19: #{tpu_custom_call.1} parent=5 // pred_region
        // Predicated region
        $region21: #{tpu_custom_call.1} parent=19 // pred_check
          %p133 = pneg %p53
        $region22: #{tpu_custom_call.1} parent=19 // pred_check_branch
          %135 = sbr.rel (%p133) target = $region24
        $region23: #{tpu_custom_call.1} parent=19 // pred_region
          %p136 = scmp.lt.s32.totalorder %s12, 1
          %s137 = scalar_select %p136, %s12, 1
          %s138 = smul.addr %s137, 8
          %s139 = scalar_lea.vmem %s1, %s138
        $region24: #{tpu_custom_call.1} parent=19 // pred_fallthru
          _
        // Predicated region
        $region25: #{tpu_custom_call.1} parent=19 // pred_check
          %p140 = pneg %p79
        $region26: #{tpu_custom_call.1} parent=19 // pred_check_branch
          %142 = sbr.rel (%p140) target = $region28
        $region27: #{tpu_custom_call.1} parent=19 // pred_region
          %p143 = scmp.lt.s32.totalorder %s12, 1
          %s144 = scalar_select %p143, %s12, 1
          %s145 = smul.addr %s144, 8
          %s146 = scalar_lea.vmem %s2, %s145
        $region28: #{tpu_custom_call.1} parent=19 // pred_fallthru
          _
      $region20: #{tpu_custom_call.1} parent=5 // pred_fallthru
        _
      %p147 = scmp.le.s32.totalorder 1, %s12
      %p148 = scmp.lt.s32.totalorder %s12, 3
      %p149 = pnand %p147, %p148
      %p150 = pneg %p149
      // Predicated region
      $region29: #{tpu_custom_call.1} parent=5 // pred_check
        _
      $region30: #{tpu_custom_call.1} parent=5 // pred_check_branch
        %152 = sbr.rel (%p149) target = $region32
      $region31: #{tpu_custom_call.1} parent=5 // pred_region
        %s153 = ssub.s32 %s12, 1
        %p154 = pneg %p33
        %p155 = pneg %p30
        %p156 = scmp.lt.s32.totalorder %s17, 1
        %s157 = scalar_select %p156, %s17, 1
        %s158 = smul.addr %s157, 8
        %s159 = scalar_lea.vmem %s1, %s158
        %p160 = pneg %p59
        %p161 = pneg %p56
        %p162 = scmp.lt.s32.totalorder %s17, 1
        %s163 = scalar_select %p162, %s17, 1
        %s164 = smul.addr %s163, 8
        %s165 = scalar_lea.vmem %s2, %s164
        %p166 = pneg %p85
        %p167 = pneg %p82
        %p168 = pneg %p111
        %p169 = pneg %p108
        %s170 = sand.u32 %s98, 1
        %s171 = scalar_lea.sflag [#allocation3], %s170
        %s172 = sand.u32 %s98, 1
        %s173 = smul.addr %s172, 8
        %s174 = scalar_lea.vmem [#allocation2], %s173
        %p175 = scmp.lt.s32.totalorder %s17, 1
        %s176 = scalar_select %p175, %s17, 1
        %s177 = smul.addr %s176, 8
        %s178 = scalar_lea.vmem %s1, %s177
        %p179 = scmp.lt.s32.totalorder %s17, 1
        %s180 = scalar_select %p179, %s17, 1
        %s181 = smul.addr %s180, 8
        %s182 = scalar_lea.vmem %s2, %s181
        %v183 = vld [vmem:[%s178] sm:$0xff]
        %v184 = vld [vmem:[%s182] sm:$0xff]
        %v185 = vld [vmem:[%s0] sm:$0x1]
        %vm186 = vcmask 130048
        %v187 = vsel %vm186, %v183, -inf
        %188 = vmax.xlane.f32.xlu0 %v187
        %v189 = vpop.xlane.xlu0 %188
        %v190 = vsub.f32 %v183, %v189
        %v191 = vmul.f32 %v190, 1.442695
        %v192 = vpow.pop %v191
        %v193 = vsel %vm186, %v192, 0.0
        %194 = vadd.xlane.f32.xlu0 %v193
        %v195 = vpop.xlane.xlu0 %194
        %v196 = vlog2.pop %v195
        %v197 = vmul.f32 %v196, 0.6931472
        %v198 = vadd.f32 %v189, %v197
        %v199 = vlaneseq
        %v200 = vand.u32 %v199, 127
        %201 = vset.pattern.permute.xlu0 0
        %202 = vperm.xlu0 %201, %v184
        %v203 = vpop.permute.xlu0 %202
        %vm204 = vcmp.eq.s32.totalorder %v200, %v203
        %v206 = vlaneseq
        %v207 = vshrl.u32 %v206, 7
        %v208 = vsub.s32 0, %v207
        %v209 = vrot.slane %v185, %v208
        %v211 = vsel %vm204, %v209, 0.0
        %v212 = vsel %vm186, %v211, 0.0
        %213 = vadd.xlane.f32.xlu0 %v212
        %v214 = vpop.xlane.xlu0 %213
        %v215 = vsel %vm204, %v183, 0.0
        %v216 = vsel %vm186, %v215, 0.0
        %217 = vadd.xlane.f32.xlu0 %v216
        %v218 = vpop.xlane.xlu0 %217
        %v219 = vsub.f32 %v198, %v218
        %v220 = vmul.f32 %v214, %v219
        %s221 = smul.u32 %s17, 8
        %v222 = vlaneseq
        %v223 = vshrl.u32 %v222, 7
        %v224 = vstv %s221
        %v225 = vadd.s32 %v224, %v223
        %vm226 = vcmp.lt.s32.totalorder %v225, 16
        %v227 = vsel %vm226, %v220, 0.0
        %vm228 = vcmask 7168
        %v229 = vsel %vm228, %v227, 0.0
        %230 = vadd.xlane.f32.xlu0 %v229
        %v231 = vpop.xlane.xlu0 %230
        %v232 = vrot.slane %v231, 4
        %v233 = vadd.f32 %v231, %v232
        %v234 = vrot.slane %v233, 2
        %v235 = vadd.f32 %v233, %v234
        %v236 = vrot.slane %v235, 1
        %v237 = vadd.f32 %v235, %v236
        %s238 = vtos %v237
        %v239 = vstv %s238
        %240 = vst [vmem:[%s174] sm:$0xff] %v239
        %s241 = sand.u32 %s98, 1
        %s242 = scalar_lea.sflag [#allocation3], %s241
        %s243 = sand.u32 %s98, 1
        %s244 = smul.addr %s243, 8
        %s245 = scalar_lea.vmem [#allocation2], %s244
        // Predicated region
        $region33: #{tpu_custom_call.1} parent=31 // pred_check
          %p246 = pneg %p108
        $region34: #{tpu_custom_call.1} parent=31 // pred_check_branch
          %248 = sbr.rel (%p246) target = $region36
        $region35: #{tpu_custom_call.1} parent=31 // pred_region
          %s250 = ssub.s32 128, 128
          %251 = vsyncadd %s242, %s250
          %s252 = smul.addr %s17, 128
          %s253 = scalar_lea.hbm %s3, %s252
          %s255 = sshll.u32 %s245, 4
          %s256 = int_to_ptr.vmem [resolvable:$true] %s255
          %258 = dma.vmem_to_hbm [thread:$0]  %s256, 128, %s253, %s242
        $region36: #{tpu_custom_call.1} parent=31 // pred_fallthru
          _
      $region32: #{tpu_custom_call.1} parent=5 // pred_fallthru
        _
      %p259 = scmp.le.s32.totalorder 2, %s12
      // Predicated region
      $region37: #{tpu_custom_call.1} parent=5 // pred_check
        %p260 = pneg %p259
      $region38: #{tpu_custom_call.1} parent=5 // pred_check_branch
        %262 = sbr.rel (%p260) target = $region40
      $region39: #{tpu_custom_call.1} parent=5 // pred_region
        %s263 = ssub.s32 %s12, 2
        // Predicated region
        $region41: #{tpu_custom_call.1} parent=39 // pred_check
          %p264 = pneg %p114
        $region42: #{tpu_custom_call.1} parent=39 // pred_check_branch
          %266 = sbr.rel (%p264) target = $region44
        $region43: #{tpu_custom_call.1} parent=39 // pred_region
          %s267 = sand.u32 %s99, 1
          %s268 = scalar_lea.sflag [#allocation3], %s267
          %s269 = sand.u32 %s99, 1
          %s270 = smul.addr %s269, 8
          %s271 = scalar_lea.vmem [#allocation2], %s270
          %272 = dma.done %s268, 128
        $region44: #{tpu_custom_call.1} parent=39 // pred_fallthru
          _
      $region40: #{tpu_custom_call.1} parent=5 // pred_fallthru
        _
    $region6: #{tpu_custom_call.1} parent=1 // loop_footer
      %s16 = sadd.s32 1, %s12
    $region7: #{tpu_custom_call.1} parent=1 // loop_footer_branch
      %11 = sbr.rel target = $region3
    $region8: #{tpu_custom_call.1} parent=1 // loop_exit
      _
    %273 = vsyncpa [#allocation3], 1
    %s274 = scalar_lea.sflag [#allocation3], 1
    %275 = vsyncpa %s274, 1

</llo_original>
